<compile_context>
chip_gen: v7x
topology: tpu7x:2x2x1
jax: 0.10.0
libtpu: 0.0.40
codegen_flags: <defaults>
</compile_context>

<pallas_src>
import functools

import numpy as np
import jax
import jax.numpy as jnp
from jax import lax
from jax.experimental import pallas as pl
from jax.experimental.pallas import tpu as pltpu


def _stft_kernel(lhs_ref, frames_ref, out_ref):
    """One frame-tile: a single fused MXU matmul with K = 2*n_fft."""
    n2 = lhs_ref.shape[0]          # 2 * n_fft
    n_fft = n2 // 2

    # RHS rows = [I_t | Q_t]; concat is lane-aligned since n_fft % 128 == 0.
    rhs = jnp.concatenate(
        [frames_ref[0].astype(jnp.bfloat16),
         frames_ref[1].astype(jnp.bfloat16)], axis=-1)        # (tn, 2*n_fft)

    # block[a, t] = sum_n lhs[a, n] * rhs[t, n]  -> rows are [Re ; Im] stacked.
    block = lax.dot_general(
        lhs_ref[...], rhs,
        dimension_numbers=(((1,), (1,)), ((), ())),
        preferred_element_type=jnp.float32)                   # (2*n_fft, tn)

    out_ref[0] = block[:n_fft].astype(out_ref.dtype)          # Re
    out_ref[1] = block[n_fft:].astype(out_ref.dtype)          # Im


@functools.lru_cache(maxsize=None)
def _dft_lhs(n_fft: int) -> jax.Array:
    """[[cw, sw], [-sw, cw]] windowed DFT operator, 1/win folded in, bf16."""
    n = np.arange(n_fft, dtype=np.float64)
    # periodic hann (matches torch.hann_window default), 1/win_length folded in
    window = (0.5 - 0.5 * np.cos(2.0 * np.pi * n / n_fft)) / float(n_fft)
    ang = 2.0 * np.pi * np.outer(n, n) / n_fft
    cw = np.cos(ang) * window[None, :]
    sw = np.sin(ang) * window[None, :]
    lhs = np.block([[cw, sw], [-sw, cw]])                     # (2N, 2N)
    return jnp.asarray(lhs, dtype=jnp.bfloat16)


def transform_spectrogram(iq_signal: jax.Array, n_fft: int = 1024, *,
                          frame_tile: int | None = None,
                          out_dtype=jnp.float32) -> jax.Array:
    """Pallas equivalent of the PyTorch transform_spectrogram.forward.

    iq_signal: float32 (2, L), hop == win == n_fft, center=False.
    Returns (2, n_fft, n_frames) with n_frames = L // n_fft.
    """
    two, L = iq_signal.shape
    assert two == 2
    assert n_fft % 128 == 0, "n_fft must be a multiple of 128 for lane alignment"
    assert L >= n_fft
    n_frames = L // n_fft  # == 1 + (L - n_fft) // hop  for hop == n_fft

    lhs = _dft_lhs(n_fft)                                     # (2N, 2N) bf16

    # Natural-layout frames: free reshape, no transpose, no pad, no extra cast.
    used = n_frames * n_fft
    x = iq_signal if used == L else iq_signal[:, :used]
    frames = x.reshape(2, n_frames, n_fft)

    # Frame tile: big enough to amortize per-step overhead, scaled down with
    # n_fft so the double-buffered in/out tiles + in-kernel bf16 copy + f32 dot
    # result stay well inside the raised VMEM limit on every generation.
    if frame_tile is None:
        frame_tile = (2048 * 128) // n_fft      # 2048 @ n_fft=128, 256 @ 1024
    tn = max(128, min(4096, (frame_tile // 128) * 128))
    tn = min(tn, pl.cdiv(n_frames, 128) * 128)  # don't over-allocate tiny inputs

    grid = (pl.cdiv(n_frames, tn),)             # ragged last block -> masked store
    # TODO(synk): on v7x consider pltpu.CORE_PARALLEL / core_map on the frame
    # axis to split steps across both TensorCores.

    out = pl.pallas_call(
        _stft_kernel,
        out_shape=jax.ShapeDtypeStruct((2, n_fft, n_frames), out_dtype),
        grid_spec=pltpu.PrefetchScalarGridSpec(
            num_scalar_prefetch=0,
            grid=grid,
            in_specs=[
                # Full DFT operator: constant block index -> stays VMEM-resident,
                # frames stream from HBM exactly once.
                pl.BlockSpec((2 * n_fft, 2 * n_fft), lambda j: (0, 0)),
                # [I ; Q] frame tile in natural layout.
                pl.BlockSpec((2, tn, n_fft), lambda j: (0, j, 0)),
            ],
            out_specs=pl.BlockSpec((2, n_fft, tn), lambda j: (0, 0, j)),
        ),
        compiler_params=pltpu.CompilerParams(
            dimension_semantics=("parallel",),
            vmem_limit_bytes=48 * 1024 * 1024),
    )(lhs, frames)
    return out


def _reference(iq_signal: jax.Array, n_fft: int) -> jax.Array:
    """Pure-JAX reference (mirrors torch.stft with these settings)."""
    win_length = n_fft
    L = iq_signal.shape[1]
    n_frames = L // n_fft
    n = jnp.arange(n_fft, dtype=jnp.float32)
    window = 0.5 - 0.5 * jnp.cos(2.0 * jnp.pi * n / n_fft)
    x = iq_signal[0] + 1j * iq_signal[1]
    frames = x[: n_frames * n_fft].reshape(n_frames, n_fft) * window
    spec = jnp.fft.fft(frames, axis=-1).T                     # (n_fft, n_frames)
    out = jnp.stack([jnp.real(spec), jnp.imag(spec)], axis=0) / win_length
    return out.astype(jnp.float32)


if __name__ == "__main__":
    # Case 1: small n_fft, frame count far below one tile (masked narrow output).
    n_fft, n_frames = 128, 8
    iq = jax.random.normal(jax.random.PRNGKey(0), (2, n_fft * n_frames),
                           dtype=jnp.float32)
    out = jax.block_until_ready(transform_spectrogram(iq, n_fft=n_fft))
    ref = _reference(iq, n_fft=n_fft)
    assert out.shape == (2, n_fft, n_frames), out.shape
    assert jnp.allclose(out, ref, atol=2e-3, rtol=2e-3), float(
        jnp.max(jnp.abs(out - ref)))

    # Case 2: larger n_fft, ragged frame count and trailing samples
    # (exercises the un-padded masked last block and the tail trim).
    n_fft2, n_frames2 = 256, 200
    iq2 = jax.random.normal(jax.random.PRNGKey(1),
                            (2, n_fft2 * n_frames2 + 37), dtype=jnp.float32)
    out2 = jax.block_until_ready(transform_spectrogram(iq2, n_fft=n_fft2))
    ref2 = _reference(iq2, n_fft=n_fft2)
    assert out2.shape == (2, n_fft2, n_frames2), out2.shape
    assert jnp.allclose(out2, ref2, atol=2e-3, rtol=2e-3), float(
        jnp.max(jnp.abs(out2 - ref2)))

    print("KERNEL_OK")
</pallas_src>

<mosaic_0001>
module attributes {stable_mosaic.version = 11 : i64} {
  func.func @_stft_kernel(%arg0: i32, %arg1: memref<256x256xbf16, #tpu.memory_space<vmem>>, %arg2: memref<2x128x128xf32, #tpu.memory_space<vmem>>, %arg3: memref<2x128x128xf32, #tpu.memory_space<vmem>>) attributes {dimension_semantics = [#tpu.dimension_semantics<parallel>], iteration_bounds = array<i64: 1>, scalar_prefetch = 0 : i64, scratch_operands = 0 : i64, tpu.core_type = #tpu.core_type<tc>, window_params = [{pipeline_mode = #tpu.pipeline_mode<synchronous>, transform_indices = @transform_0, window_bounds = array<i64: 256, 256>}, {transform_indices = @transform_1, window_bounds = array<i64: 2, 128, 128>}, {transform_indices = @transform_2, window_bounds = array<i64: 2, 128, 128>}]} {
    %c0 = arith.constant 0 : index
    %c0_0 = arith.constant 0 : index
    %c0_1 = arith.constant 0 : index
    %0 = vector.load %arg2[%c0, %c0_0, %c0_1] : memref<2x128x128xf32, #tpu.memory_space<vmem>>, vector<1x128x128xf32>
    %1 = vector.shape_cast %0 : vector<1x128x128xf32> to vector<128x128xf32>
    %2 = arith.truncf %1 : vector<128x128xf32> to vector<128x128xbf16>
    %c1 = arith.constant 1 : index
    %c0_2 = arith.constant 0 : index
    %c0_3 = arith.constant 0 : index
    %3 = vector.load %arg2[%c1, %c0_2, %c0_3] : memref<2x128x128xf32, #tpu.memory_space<vmem>>, vector<1x128x128xf32>
    %4 = vector.shape_cast %3 : vector<1x128x128xf32> to vector<128x128xf32>
    %5 = arith.truncf %4 : vector<128x128xf32> to vector<128x128xbf16>
    %6 = tpu.concatenate %2, %5 in 1 : vector<128x128xbf16>, vector<128x128xbf16> -> vector<128x256xbf16>
    %c0_4 = arith.constant 0 : index
    %c0_5 = arith.constant 0 : index
    %7 = vector.load %arg1[%c0_4, %c0_5] : memref<256x256xbf16, #tpu.memory_space<vmem>>, vector<256x256xbf16>
    %cst = arith.constant dense<0.000000e+00> : vector<256x128xf32>
    %8 = tpu.matmul %7, %6, %cst {dimension_numbers = #tpu.dot_dimension_numbers<[1], [1], [0], [0], [0, 0, 1, 0], [], []>} : vector<256x256xbf16>, vector<128x256xbf16>, vector<256x128xf32> -> vector<256x128xf32>
    %9 = vector.extract_strided_slice %8 {offsets = [0, 0], sizes = [128, 128], strides = [1, 1]} : vector<256x128xf32> to vector<128x128xf32>
    %c0_6 = arith.constant 0 : index
    %c0_7 = arith.constant 0 : index
    %c0_8 = arith.constant 0 : index
    %10 = vector.load %arg3[%c0_6, %c0_7, %c0_8] : memref<2x128x128xf32, #tpu.memory_space<vmem>>, vector<1x128x128xf32>
    %11 = vector.shape_cast %10 : vector<1x128x128xf32> to vector<128x128xf32>
    %12 = vector.shape_cast %9 : vector<128x128xf32> to vector<1x128x128xf32>
    tpu.vector_store %arg3[%c0_6, %c0_7, %c0_8], %12 {strides = array<i32>} : memref<2x128x128xf32, #tpu.memory_space<vmem>>, vector<1x128x128xf32>,
    %13 = vector.extract_strided_slice %8 {offsets = [128, 0], sizes = [128, 128], strides = [1, 1]} : vector<256x128xf32> to vector<128x128xf32>
    %c1_9 = arith.constant 1 : index
    %c0_10 = arith.constant 0 : index
    %c0_11 = arith.constant 0 : index
    %14 = vector.load %arg3[%c1_9, %c0_10, %c0_11] : memref<2x128x128xf32, #tpu.memory_space<vmem>>, vector<1x128x128xf32>
    %15 = vector.shape_cast %14 : vector<1x128x128xf32> to vector<128x128xf32>
    %16 = vector.shape_cast %13 : vector<128x128xf32> to vector<1x128x128xf32>
    tpu.vector_store %arg3[%c1_9, %c0_10, %c0_11], %16 {strides = array<i32>} : memref<2x128x128xf32, #tpu.memory_space<vmem>>, vector<1x128x128xf32>,
    return
  }
  func.func @transform_0(%arg0: i32) -> (i32, i32) {
    %c0_i32 = arith.constant 0 : i32
    %c0_i32_0 = arith.constant 0 : i32
    %c0_i32_1 = arith.constant 0 : i32
    return %c0_i32, %c0_i32_0 : i32, i32
  }
  func.func @transform_1(%arg0: i32) -> (i32, i32, i32) {
    %c0_i32 = arith.constant 0 : i32
    %c0_i32_0 = arith.constant 0 : i32
    %c0_i32_1 = arith.constant 0 : i32
    return %c0_i32, %arg0, %c0_i32_0 : i32, i32, i32
  }
  func.func @transform_2(%arg0: i32) -> (i32, i32, i32) {
    %c0_i32 = arith.constant 0 : i32
    %c0_i32_0 = arith.constant 0 : i32
    %c0_i32_1 = arith.constant 0 : i32
    return %c0_i32, %c0_i32_0, %arg0 : i32, i32, i32
  }
}

</mosaic_0001>

<llo_original>
// kernel: tpu_custom_call.1
$region0: #{tpu_custom_call.1}
  #allocation0 [shape = 'u32[]', space=smem, size = 0x4, offset = 0x4, fixed_abs, tag = 'smem constant byte address 0x4 - core index']
  #allocation1 [shape = 'u32[144,128]{1,0:T(1,128)}', space=vmem, size = 0x12000, scoped, tag = 'internal scratch']
  #allocation6 [shape = 's32[]', space=sflag, size = 0x4, offset = 0, fixed_abs, tag = 'sflag constant byte address 0x0 - dummy sync flag']
  %s0 = inlined_call_operand.hbm [shape: bf16[256,256], index: 0, kind: input, shape index: {}]
  %s1 = inlined_call_operand.hbm [shape: f32[2,8,128], index: 1, kind: input, shape index: {}]
  %s2 = inlined_call_operand.vmem [shape: f32[2,128,8], index: 2, kind: output, shape index: {}]
  %s3 = sld [smem:[#allocation0]]
  $region26: #{tpu_custom_call.1} parent=0
    _
  %s5 = ssub.s32 1, %s3
  %s6 = scalar_select 0, %s5, %s3
  $region1: #{tpu_custom_call.1} parent=0
    #allocation2 [shape = 'u8[131072]{0}', space=vmem, size = 0x20000, scoped, tag = 'input window, operand 0, single buffered']
    #allocation3 [shape = 's32[1]{0}', space=sflag, size = 0x4, scoped, tag = 'scoped memory for tpu_custom_call.1']
    #allocation4 [shape = 'u8[131072]{0}', space=vmem, size = 0x20000, scoped, tag = 'input window, operand 1, single buffered']
    #allocation5 [shape = 's32[1]{0}', space=sflag, size = 0x4, scoped, tag = 'scoped memory for tpu_custom_call.1']
    %7 = vsyncpa [#allocation3], 0
    %8 = vsyncpa [#allocation5], 0
    // Predicated region
    $region2: #{tpu_custom_call.1} parent=1 // pred_check
      _
    $region3: #{tpu_custom_call.1} parent=1 // pred_check_branch
      %10 = sbr.rel (0) target = $region5
    $region4: #{tpu_custom_call.1} parent=1 // pred_region
      %s12 = ssub.s32 4096, 4096
      %13 = vsyncadd [#allocation3], %s12
      %s14 = sshll.u32 [#allocation2], 4
      %s15 = int_to_ptr.vmem [resolvable:$true] %s14
      %20 = dma.hbm_to_vmem [thread:$0]  %s0, 4096, %s15, [#allocation3], 128, 128, 8
    $region5: #{tpu_custom_call.1} parent=1 // pred_fallthru
      _
    // Predicated region
    $region6: #{tpu_custom_call.1} parent=1 // pred_check
      _
    $region7: #{tpu_custom_call.1} parent=1 // pred_check_branch
      %22 = sbr.rel (0) target = $region9
    $region8: #{tpu_custom_call.1} parent=1 // pred_region
      #allocation7 [shape = 'u32[6]{0}', space=smem, size = 0x18, scoped, tag = 'DMA stride descriptor']
      %s24 = ssub.s32 4096, 256
      %25 = vsyncadd [#allocation5], %s24
      %s27 = sshll.u32 1, 14
      %s28 = sxor.u32 4294967295, %s27
      %s30 = sld [smem:[#allocation0]]
      %s31 = sadd.s32 2, %s30
      %s33 = sshll.u32 7, 26
      %s34 = sxor.u32 4294967295, %s33
      %s35 = sand.u32 0, %s34
      %s36 = sshll.u32 %s31, 26
      %s37 = sor.u32 %s35, %s36
      %s38 = sshll.u32 [#allocation4], 4
      %s39 = int_to_ptr.vmem [resolvable:$true] %s38
      %45 = sst [smem:[#allocation7]] 128
      %s46 = scalar_lea.smem [#allocation7], 1
      %47 = sst [smem:[%s46]] 2048
      %s48 = scalar_lea.smem [#allocation7], 2
      %49 = sst [smem:[%s48]] 1
      %s50 = scalar_lea.smem [#allocation7], 3
      %51 = sst [smem:[%s50]] 128
      %s52 = scalar_lea.smem [#allocation7], 4
      %53 = sst [smem:[%s52]] 128
      %s54 = scalar_lea.smem [#allocation7], 5
      %55 = sst [smem:[%s54]] 8
      %57 = dma.general %s1, 256, %s39, [#allocation5], [#allocation6], [#allocation7], %s37, 0
    $region9: #{tpu_custom_call.1} parent=1 // pred_fallthru
      _
    // Predicated region
    $region10: #{tpu_custom_call.1} parent=1 // pred_check
      _
    $region11: #{tpu_custom_call.1} parent=1 // pred_check_branch
      %59 = sbr.rel (0) target = $region13
    $region12: #{tpu_custom_call.1} parent=1 // pred_region
      %60 = dma.done [#allocation3], 4096
    $region13: #{tpu_custom_call.1} parent=1 // pred_fallthru
      _
    // Predicated region
    $region14: #{tpu_custom_call.1} parent=1 // pred_check
      _
    $region15: #{tpu_custom_call.1} parent=1 // pred_check_branch
      %62 = sbr.rel (0) target = $region17
    $region16: #{tpu_custom_call.1} parent=1 // pred_region
      %63 = dma.done [#allocation5], 4096
    $region17: #{tpu_custom_call.1} parent=1 // pred_fallthru
      _
    %v65 = vld [vmem:[#allocation4] sm:$0xff]
    %v66 = vld [vmem:[#allocation4 + $0x8] sm:$0xff]
    %v67 = vld [vmem:[#allocation4 + $0x10] sm:$0xff]
    %v68 = vld [vmem:[#allocation4 + $0x18] sm:$0xff]
    %v69 = vld [vmem:[#allocation4 + $0x20] sm:$0xff]
    %v70 = vld [vmem:[#allocation4 + $0x28] sm:$0xff]
    %v71 = vld [vmem:[#allocation4 + $0x30] sm:$0xff]
    %v72 = vld [vmem:[#allocation4 + $0x38] sm:$0xff]
    %v73 = vld [vmem:[#allocation4 + $0x40] sm:$0xff]
    %v74 = vld [vmem:[#allocation4 + $0x48] sm:$0xff]
    %v75 = vld [vmem:[#allocation4 + $0x50] sm:$0xff]
    %v76 = vld [vmem:[#allocation4 + $0x58] sm:$0xff]
    %v77 = vld [vmem:[#allocation4 + $0x60] sm:$0xff]
    %v78 = vld [vmem:[#allocation4 + $0x68] sm:$0xff]
    %v79 = vld [vmem:[#allocation4 + $0x70] sm:$0xff]
    %v80 = vld [vmem:[#allocation4 + $0x78] sm:$0xff]
    %v81 = vpack.c.bf16 %v66, %v65
    %v82 = vpack.c.bf16 %v68, %v67
    %v83 = vpack.c.bf16 %v70, %v69
    %v84 = vpack.c.bf16 %v72, %v71
    %v85 = vpack.c.bf16 %v74, %v73
    %v86 = vpack.c.bf16 %v76, %v75
    %v87 = vpack.c.bf16 %v78, %v77
    %v88 = vpack.c.bf16 %v80, %v79
    %s89 = scalar_lea.vmem [#allocation4], 128
    %v90 = vld [vmem:[%s89] sm:$0xff]
    %v91 = vld [vmem:[%s89 + $0x8] sm:$0xff]
    %v92 = vld [vmem:[%s89 + $0x10] sm:$0xff]
    %v93 = vld [vmem:[%s89 + $0x18] sm:$0xff]
    %v94 = vld [vmem:[%s89 + $0x20] sm:$0xff]
    %v95 = vld [vmem:[%s89 + $0x28] sm:$0xff]
    %v96 = vld [vmem:[%s89 + $0x30] sm:$0xff]
    %v97 = vld [vmem:[%s89 + $0x38] sm:$0xff]
    %v98 = vld [vmem:[%s89 + $0x40] sm:$0xff]
    %v99 = vld [vmem:[%s89 + $0x48] sm:$0xff]
    %v100 = vld [vmem:[%s89 + $0x50] sm:$0xff]
    %v101 = vld [vmem:[%s89 + $0x58] sm:$0xff]
    %v102 = vld [vmem:[%s89 + $0x60] sm:$0xff]
    %v103 = vld [vmem:[%s89 + $0x68] sm:$0xff]
    %v104 = vld [vmem:[%s89 + $0x70] sm:$0xff]
    %v105 = vld [vmem:[%s89 + $0x78] sm:$0xff]
    %v106 = vpack.c.bf16 %v91, %v90
    %v107 = vpack.c.bf16 %v93, %v92
    %v108 = vpack.c.bf16 %v95, %v94
    %v109 = vpack.c.bf16 %v97, %v96
    %v110 = vpack.c.bf16 %v99, %v98
    %v111 = vpack.c.bf16 %v101, %v100
    %v112 = vpack.c.bf16 %v103, %v102
    %v113 = vpack.c.bf16 %v105, %v104
    %v114 = vld [vmem:[#allocation2] sm:$0xff]
    %v115 = vld [vmem:[#allocation2 + $0x8] sm:$0xff]
    %v116 = vld [vmem:[#allocation2 + $0x10] sm:$0xff]
    %v117 = vld [vmem:[#allocation2 + $0x18] sm:$0xff]
    %v118 = vld [vmem:[#allocation2 + $0x20] sm:$0xff]
    %v119 = vld [vmem:[#allocation2 + $0x28] sm:$0xff]
    %v120 = vld [vmem:[#allocation2 + $0x30] sm:$0xff]
    %v121 = vld [vmem:[#allocation2 + $0x38] sm:$0xff]
    %v122 = vld [vmem:[#allocation2 + $0x40] sm:$0xff]
    %v123 = vld [vmem:[#allocation2 + $0x48] sm:$0xff]
    %v124 = vld [vmem:[#allocation2 + $0x50] sm:$0xff]
    %v125 = vld [vmem:[#allocation2 + $0x58] sm:$0xff]
    %v126 = vld [vmem:[#allocation2 + $0x60] sm:$0xff]
    %v127 = vld [vmem:[#allocation2 + $0x68] sm:$0xff]
    %v128 = vld [vmem:[#allocation2 + $0x70] sm:$0xff]
    %v129 = vld [vmem:[#allocation2 + $0x78] sm:$0xff]
    %v130 = vld [vmem:[#allocation2 + $0x80] sm:$0xff]
    %v131 = vld [vmem:[#allocation2 + $0x88] sm:$0xff]
    %v132 = vld [vmem:[#allocation2 + $0x90] sm:$0xff]
    %v133 = vld [vmem:[#allocation2 + $0x98] sm:$0xff]
    %v134 = vld [vmem:[#allocation2 + $0xa0] sm:$0xff]
    %v135 = vld [vmem:[#allocation2 + $0xa8] sm:$0xff]
    %v136 = vld [vmem:[#allocation2 + $0xb0] sm:$0xff]
    %v137 = vld [vmem:[#allocation2 + $0xb8] sm:$0xff]
    %v138 = vld [vmem:[#allocation2 + $0xc0] sm:$0xff]
    %v139 = vld [vmem:[#allocation2 + $0xc8] sm:$0xff]
    %v140 = vld [vmem:[#allocation2 + $0xd0] sm:$0xff]
    %v141 = vld [vmem:[#allocation2 + $0xd8] sm:$0xff]
    %v142 = vld [vmem:[#allocation2 + $0xe0] sm:$0xff]
    %v143 = vld [vmem:[#allocation2 + $0xe8] sm:$0xff]
    %v144 = vld [vmem:[#allocation2 + $0xf0] sm:$0xff]
    %v145 = vld [vmem:[#allocation2 + $0xf8] sm:$0xff]
    %v178 = vunpack.c.l.b16 %v114
    %v179 = vunpack.c.h.b16 %v114
    %v180 = vunpack.c.l.b16 %v115
    %v181 = vunpack.c.h.b16 %v115
    %v182 = vunpack.c.l.b16 %v116
    %v183 = vunpack.c.h.b16 %v116
    %v184 = vunpack.c.l.b16 %v117
    %v185 = vunpack.c.h.b16 %v117
    %v186 = vunpack.c.l.b16 %v118
    %v187 = vunpack.c.h.b16 %v118
    %v188 = vunpack.c.l.b16 %v119
    %v189 = vunpack.c.h.b16 %v119
    %v190 = vunpack.c.l.b16 %v120
    %v191 = vunpack.c.h.b16 %v120
    %v192 = vunpack.c.l.b16 %v121
    %v193 = vunpack.c.h.b16 %v121
    %v194 = vunpack.c.l.b16 %v122
    %v195 = vunpack.c.h.b16 %v122
    %v196 = vunpack.c.l.b16 %v123
    %v197 = vunpack.c.h.b16 %v123
    %v198 = vunpack.c.l.b16 %v124
    %v199 = vunpack.c.h.b16 %v124
    %v200 = vunpack.c.l.b16 %v125
    %v201 = vunpack.c.h.b16 %v125
    %v202 = vunpack.c.l.b16 %v126
    %v203 = vunpack.c.h.b16 %v126
    %v204 = vunpack.c.l.b16 %v127
    %v205 = vunpack.c.h.b16 %v127
    %v206 = vunpack.c.l.b16 %v128
    %v207 = vunpack.c.h.b16 %v128
    %v208 = vunpack.c.l.b16 %v129
    %v209 = vunpack.c.h.b16 %v129
    %v210 = vunpack.c.l.b16 %v130
    %v211 = vunpack.c.h.b16 %v130
    %v212 = vunpack.c.l.b16 %v131
    %v213 = vunpack.c.h.b16 %v131
    %v214 = vunpack.c.l.b16 %v132
    %v215 = vunpack.c.h.b16 %v132
    %v216 = vunpack.c.l.b16 %v133
    %v217 = vunpack.c.h.b16 %v133
    %v218 = vunpack.c.l.b16 %v134
    %v219 = vunpack.c.h.b16 %v134
    %v220 = vunpack.c.l.b16 %v135
    %v221 = vunpack.c.h.b16 %v135
    %v222 = vunpack.c.l.b16 %v136
    %v223 = vunpack.c.h.b16 %v136
    %v224 = vunpack.c.l.b16 %v137
    %v225 = vunpack.c.h.b16 %v137
    %v226 = vunpack.c.l.b16 %v138
    %v227 = vunpack.c.h.b16 %v138
    %v228 = vunpack.c.l.b16 %v139
    %v229 = vunpack.c.h.b16 %v139
    %v230 = vunpack.c.l.b16 %v140
    %v231 = vunpack.c.h.b16 %v140
    %v232 = vunpack.c.l.b16 %v141
    %v233 = vunpack.c.h.b16 %v141
    %v234 = vunpack.c.l.b16 %v142
    %v235 = vunpack.c.h.b16 %v142
    %v236 = vunpack.c.l.b16 %v143
    %v237 = vunpack.c.h.b16 %v143
    %v238 = vunpack.c.l.b16 %v144
    %v239 = vunpack.c.h.b16 %v144
    %v240 = vunpack.c.l.b16 %v145
    %v241 = vunpack.c.h.b16 %v145
    %v242 = vpack.c.b16 %v180, %v178
    %v243 = vpack.c.b16 %v181, %v179
    %v244 = vpack.c.b16 %v184, %v182
    %v245 = vpack.c.b16 %v185, %v183
    %v246 = vpack.c.b16 %v188, %v186
    %v247 = vpack.c.b16 %v189, %v187
    %v248 = vpack.c.b16 %v192, %v190
    %v249 = vpack.c.b16 %v193, %v191
    %v250 = vpack.c.b16 %v196, %v194
    %v251 = vpack.c.b16 %v197, %v195
    %v252 = vpack.c.b16 %v200, %v198
    %v253 = vpack.c.b16 %v201, %v199
    %v254 = vpack.c.b16 %v204, %v202
    %v255 = vpack.c.b16 %v205, %v203
    %v256 = vpack.c.b16 %v208, %v206
    %v257 = vpack.c.b16 %v209, %v207
    %v258 = vpack.c.b16 %v212, %v210
    %v259 = vpack.c.b16 %v213, %v211
    %v260 = vpack.c.b16 %v216, %v214
    %v261 = vpack.c.b16 %v217, %v215
    %v262 = vpack.c.b16 %v220, %v218
    %v263 = vpack.c.b16 %v221, %v219
    %v264 = vpack.c.b16 %v224, %v222
    %v265 = vpack.c.b16 %v225, %v223
    %v266 = vpack.c.b16 %v228, %v226
    %v267 = vpack.c.b16 %v229, %v227
    %v268 = vpack.c.b16 %v232, %v230
    %v269 = vpack.c.b16 %v233, %v231
    %v270 = vpack.c.b16 %v236, %v234
    %v271 = vpack.c.b16 %v237, %v235
    %v272 = vpack.c.b16 %v240, %v238
    %v273 = vpack.c.b16 %v241, %v239
    %306 = vmatprep.subr.bf16.mxu0 %v106
    %307 = vmatpush1.bf16.xpose.msra.mxu0 %v81
    %308 = vmatprep.subr.bf16.mxu0 %v107
    %309 = vmatpush1.bf16.xpose.msra.mxu0 %v82
    %310 = vmatprep.subr.bf16.mxu0 %v108
    %311 = vmatpush1.bf16.xpose.msra.mxu0 %v83
    %312 = vmatprep.subr.bf16.mxu0 %v109
    %313 = vmatpush1.bf16.xpose.msra.mxu0 %v84
    %314 = vmatprep.subr.bf16.mxu0 %v110
    %315 = vmatpush1.bf16.xpose.msra.mxu0 %v85
    %316 = vmatprep.subr.bf16.mxu0 %v111
    %317 = vmatpush1.bf16.xpose.msra.mxu0 %v86
    %318 = vmatprep.subr.bf16.mxu0 %v112
    %319 = vmatpush1.bf16.xpose.msra.mxu0 %v87
    %320 = vmatprep.subr.bf16.mxu0 %v113
    %321 = vmatpush1.bf16.xpose.msra.mxu0 %v88
    %322 = vmatprep.subr.bf16.mxu0 0
    %323 = vmatpush1.bf16.xpose.msra.mxu0 0
    %324 = vmatprep.subr.bf16.mxu0 0
    %325 = vmatpush1.bf16.xpose.msra.mxu0 0
    %326 = vmatprep.subr.bf16.mxu0 0
    %327 = vmatpush1.bf16.xpose.msra.mxu0 0
    %328 = vmatprep.subr.bf16.mxu0 0
    %329 = vmatpush1.bf16.xpose.msra.mxu0 0
    %330 = vmatprep.subr.bf16.mxu0 0
    %331 = vmatpush1.bf16.xpose.msra.mxu0 0
    %332 = vmatprep.subr.bf16.mxu0 0
    %333 = vmatpush1.bf16.xpose.msra.mxu0 0
    %334 = vmatprep.subr.bf16.mxu0 0
    %335 = vmatpush1.bf16.xpose.msra.mxu0 0
    %336 = vmatprep.subr.bf16.mxu0 0
    %337 = vmatpush1.bf16.xpose.msra.mxu0 0
    %338 = vmatprep.mubr.bf16.mxu0 %v243
    %339 = vmatmul.mubr.bf16.gmra.mrb[0].mxu0 %v242
    %v340 = vpop.f32.mrb[0].mxu0
    %v341 = vadd.f32 0.0, %v340
    %v342 = vpop.f32.mrb[0].mxu0
    %v343 = vpop.f32.mrb[0].mxu0
    %v344 = vadd.f32 0.0, %v343
    %v345 = vpop.f32.mrb[0].mxu0
    %346 = vmatprep.mubr.bf16.mxu0 %v245
    %347 = vmatmul.mubr.bf16.gmra.mrb[0].mxu0 %v244
    %v348 = vpop.f32.mrb[0].mxu0
    %v349 = vadd.f32 0.0, %v348
    %v350 = vpop.f32.mrb[0].mxu0
    %v351 = vpop.f32.mrb[0].mxu0
    %v352 = vadd.f32 0.0, %v351
    %v353 = vpop.f32.mrb[0].mxu0
    %354 = vmatprep.mubr.bf16.mxu0 %v247
    %355 = vmatmul.mubr.bf16.gmra.mrb[0].mxu0 %v246
    %v356 = vpop.f32.mrb[0].mxu0
    %v357 = vadd.f32 0.0, %v356
    %v358 = vpop.f32.mrb[0].mxu0
    %v359 = vpop.f32.mrb[0].mxu0
    %v360 = vadd.f32 0.0, %v359
    %v361 = vpop.f32.mrb[0].mxu0
    %362 = vmatprep.mubr.bf16.mxu0 %v249
    %363 = vmatmul.mubr.bf16.gmra.mrb[0].mxu0 %v248
    %v364 = vpop.f32.mrb[0].mxu0
    %v365 = vadd.f32 0.0, %v364
    %v366 = vpop.f32.mrb[0].mxu0
    %v367 = vpop.f32.mrb[0].mxu0
    %v368 = vadd.f32 0.0, %v367
    %v369 = vpop.f32.mrb[0].mxu0
    %370 = vmatprep.mubr.bf16.mxu0 %v251
    %371 = vmatmul.mubr.bf16.gmra.mrb[0].mxu0 %v250
    %v372 = vpop.f32.mrb[0].mxu0
    %v373 = vadd.f32 0.0, %v372
    %v374 = vpop.f32.mrb[0].mxu0
    %v375 = vpop.f32.mrb[0].mxu0
    %v376 = vadd.f32 0.0, %v375
    %v377 = vpop.f32.mrb[0].mxu0
    %378 = vmatprep.mubr.bf16.mxu0 %v253
    %379 = vmatmul.mubr.bf16.gmra.mrb[0].mxu0 %v252
    %v380 = vpop.f32.mrb[0].mxu0
    %v381 = vadd.f32 0.0, %v380
    %v382 = vpop.f32.mrb[0].mxu0
    %v383 = vpop.f32.mrb[0].mxu0
    %v384 = vadd.f32 0.0, %v383
    %v385 = vpop.f32.mrb[0].mxu0
    %386 = vmatprep.mubr.bf16.mxu0 %v255
    %387 = vmatmul.mubr.bf16.gmra.mrb[0].mxu0 %v254
    %v388 = vpop.f32.mrb[0].mxu0
    %v389 = vadd.f32 0.0, %v388
    %v390 = vpop.f32.mrb[0].mxu0
    %v391 = vpop.f32.mrb[0].mxu0
    %v392 = vadd.f32 0.0, %v391
    %v393 = vpop.f32.mrb[0].mxu0
    %394 = vmatprep.mubr.bf16.mxu0 %v257
    %395 = vmatmul.mubr.bf16.gmra.mrb[0].mxu0 %v256
    %v396 = vpop.f32.mrb[0].mxu0
    %v397 = vadd.f32 0.0, %v396
    %v398 = vpop.f32.mrb[0].mxu0
    %v399 = vpop.f32.mrb[0].mxu0
    %v400 = vadd.f32 0.0, %v399
    %v401 = vpop.f32.mrb[0].mxu0
    %402 = vmatprep.mubr.bf16.mxu0 %v259
    %403 = vmatmul.mubr.bf16.gmra.mrb[0].mxu0 %v258
    %v404 = vpop.f32.mrb[0].mxu0
    %v405 = vadd.f32 0.0, %v404
    %v406 = vpop.f32.mrb[0].mxu0
    %v407 = vpop.f32.mrb[0].mxu0
    %v408 = vadd.f32 0.0, %v407
    %v409 = vpop.f32.mrb[0].mxu0
    %410 = vmatprep.mubr.bf16.mxu0 %v261
    %411 = vmatmul.mubr.bf16.gmra.mrb[0].mxu0 %v260
    %v412 = vpop.f32.mrb[0].mxu0
    %v413 = vadd.f32 0.0, %v412
    %v414 = vpop.f32.mrb[0].mxu0
    %v415 = vpop.f32.mrb[0].mxu0
    %v416 = vadd.f32 0.0, %v415
    %v417 = vpop.f32.mrb[0].mxu0
    %418 = vmatprep.mubr.bf16.mxu0 %v263
    %419 = vmatmul.mubr.bf16.gmra.mrb[0].mxu0 %v262
    %v420 = vpop.f32.mrb[0].mxu0
    %v421 = vadd.f32 0.0, %v420
    %v422 = vpop.f32.mrb[0].mxu0
    %v423 = vpop.f32.mrb[0].mxu0
    %v424 = vadd.f32 0.0, %v423
    %v425 = vpop.f32.mrb[0].mxu0
    %426 = vmatprep.mubr.bf16.mxu0 %v265
    %427 = vmatmul.mubr.bf16.gmra.mrb[0].mxu0 %v264
    %v428 = vpop.f32.mrb[0].mxu0
    %v429 = vadd.f32 0.0, %v428
    %v430 = vpop.f32.mrb[0].mxu0
    %v431 = vpop.f32.mrb[0].mxu0
    %v432 = vadd.f32 0.0, %v431
    %v433 = vpop.f32.mrb[0].mxu0
    %434 = vmatprep.mubr.bf16.mxu0 %v267
    %435 = vmatmul.mubr.bf16.gmra.mrb[0].mxu0 %v266
    %v436 = vpop.f32.mrb[0].mxu0
    %v437 = vadd.f32 0.0, %v436
    %v438 = vpop.f32.mrb[0].mxu0
    %v439 = vpop.f32.mrb[0].mxu0
    %v440 = vadd.f32 0.0, %v439
    %v441 = vpop.f32.mrb[0].mxu0
    %442 = vmatprep.mubr.bf16.mxu0 %v269
    %443 = vmatmul.mubr.bf16.gmra.mrb[0].mxu0 %v268
    %v444 = vpop.f32.mrb[0].mxu0
    %v445 = vadd.f32 0.0, %v444
    %v446 = vpop.f32.mrb[0].mxu0
    %v447 = vpop.f32.mrb[0].mxu0
    %v448 = vadd.f32 0.0, %v447
    %v449 = vpop.f32.mrb[0].mxu0
    %450 = vmatprep.mubr.bf16.mxu0 %v271
    %451 = vmatmul.mubr.bf16.gmra.mrb[0].mxu0 %v270
    %v452 = vpop.f32.mrb[0].mxu0
    %v453 = vadd.f32 0.0, %v452
    %v454 = vpop.f32.mrb[0].mxu0
    %v455 = vpop.f32.mrb[0].mxu0
    %v456 = vadd.f32 0.0, %v455
    %v457 = vpop.f32.mrb[0].mxu0
    %458 = vmatprep.mubr.bf16.mxu0 %v273
    %459 = vmatmul.mubr.bf16.gmra.mrb[0].mxu0 %v272
    %v460 = vpop.f32.mrb[0].mxu0
    %v461 = vadd.f32 0.0, %v460
    %v462 = vpop.f32.mrb[0].mxu0
    %v463 = vpop.f32.mrb[0].mxu0
    %v464 = vadd.f32 0.0, %v463
    %v465 = vpop.f32.mrb[0].mxu0
    %466 = vdwg.mxu0
    %467 = vst [vmem:[%s2] sm:$0xff] %v341
    %468 = vst [vmem:[%s2 + $0x8] sm:$0xff] %v344
    %469 = vst [vmem:[%s2 + $0x10] sm:$0xff] %v349
    %470 = vst [vmem:[%s2 + $0x18] sm:$0xff] %v352
    %471 = vst [vmem:[%s2 + $0x20] sm:$0xff] %v357
    %472 = vst [vmem:[%s2 + $0x28] sm:$0xff] %v360
    %473 = vst [vmem:[%s2 + $0x30] sm:$0xff] %v365
    %474 = vst [vmem:[%s2 + $0x38] sm:$0xff] %v368
    %475 = vst [vmem:[%s2 + $0x40] sm:$0xff] %v373
    %476 = vst [vmem:[%s2 + $0x48] sm:$0xff] %v376
    %477 = vst [vmem:[%s2 + $0x50] sm:$0xff] %v381
    %478 = vst [vmem:[%s2 + $0x58] sm:$0xff] %v384
    %479 = vst [vmem:[%s2 + $0x60] sm:$0xff] %v389
    %480 = vst [vmem:[%s2 + $0x68] sm:$0xff] %v392
    %481 = vst [vmem:[%s2 + $0x70] sm:$0xff] %v397
    %482 = vst [vmem:[%s2 + $0x78] sm:$0xff] %v400
    %s483 = scalar_lea.vmem %s2, 128
    %484 = vst [vmem:[%s483] sm:$0xff] %v405
    %485 = vst [vmem:[%s483 + $0x8] sm:$0xff] %v408
    %486 = vst [vmem:[%s483 + $0x10] sm:$0xff] %v413
    %487 = vst [vmem:[%s483 + $0x18] sm:$0xff] %v416
    %488 = vst [vmem:[%s483 + $0x20] sm:$0xff] %v421
    %489 = vst [vmem:[%s483 + $0x28] sm:$0xff] %v424
    %490 = vst [vmem:[%s483 + $0x30] sm:$0xff] %v429
    %491 = vst [vmem:[%s483 + $0x38] sm:$0xff] %v432
    %492 = vst [vmem:[%s483 + $0x40] sm:$0xff] %v437
    %493 = vst [vmem:[%s483 + $0x48] sm:$0xff] %v440
    %494 = vst [vmem:[%s483 + $0x50] sm:$0xff] %v445
    %495 = vst [vmem:[%s483 + $0x58] sm:$0xff] %v448
    %496 = vst [vmem:[%s483 + $0x60] sm:$0xff] %v453
    %497 = vst [vmem:[%s483 + $0x68] sm:$0xff] %v456
    %498 = vst [vmem:[%s483 + $0x70] sm:$0xff] %v461
    %499 = vst [vmem:[%s483 + $0x78] sm:$0xff] %v464
    // Predicated region
    $region18: #{tpu_custom_call.1} parent=1 // pred_check
      _
    $region19: #{tpu_custom_call.1} parent=1 // pred_check_branch
      %501 = sbr.rel (0) target = $region21
    $region20: #{tpu_custom_call.1} parent=1 // pred_region
      _
    $region21: #{tpu_custom_call.1} parent=1 // pred_fallthru
      _
    // Predicated region
    $region22: #{tpu_custom_call.1} parent=1 // pred_check
      _
    $region23: #{tpu_custom_call.1} parent=1 // pred_check_branch
      %503 = sbr.rel (0) target = $region25
    $region24: #{tpu_custom_call.1} parent=1 // pred_region
      _
    $region25: #{tpu_custom_call.1} parent=1 // pred_fallthru
      _
    %504 = vsyncpa [#allocation3], 1
    %505 = vsyncpa [#allocation5], 1

</llo_original>
